<compile_context>
chip_gen: v7x
topology: tpu7x:2x2x1
jax: 0.10.0
libtpu: 0.0.40
codegen_flags: <defaults>
</compile_context>

<pallas_src>
import functools

import jax
import jax.numpy as jnp
from jax.experimental import pallas as pl
from jax.experimental.pallas import tpu as pltpu

INPUT_SIZE = 2
MLP_DIM = [128, 128]
NOISE_STD = 0.025


def _round_up(x, m):
    return ((x + m - 1) // m) * m


def _make_kernel(use_bf16_matmul):
    def kernel(x_ref, w1_ref, b1_ref, w2_ref, b2_ref, w3_ref, b3_ref, o_ref):
        # x_ref: (D_in, TB)   w1: (H1, D_in)   b1: (H1, 1)
        # w2: (H2, H1)        b2: (H2, 1)      w3: (1, H2)   b3: (1, 1) in SMEM
        xT = x_ref[...]
        d_in = xT.shape[0]
        w1 = w1_ref[...]

        # ---- Layer 1: Linear(D_in -> H1) on the VPU (K=2 matmul would waste MXU).
        h = w1[:, 0:1] * xT[0:1, :]
        for k in range(1, d_in):  # static unroll (d_in = 2)
            h = h + w1[:, k:k + 1] * xT[k:k + 1, :]
        h = jnp.maximum(h + b1_ref[...], 0.0)            # (H1, TB)
        # Dropout(p=0.01) is identity in eval mode.

        # ---- Layer 2: Linear(H1 -> H2), the only MXU-worthy (128x128) matmul.
        w2 = w2_ref[...]
        if use_bf16_matmul:
            h2 = jnp.dot(w2.astype(jnp.bfloat16), h.astype(jnp.bfloat16),
                         preferred_element_type=jnp.float32)
        else:
            h2 = jnp.dot(w2, h, preferred_element_type=jnp.float32)
        h2 = jnp.maximum(h2 + b2_ref[...], 0.0)           # (H2, TB)

        # ---- Layer 3: Linear(H2 -> 1); (1,H2)@(H2,TB) gives a lane-dense (1, TB).
        o = jnp.dot(w3_ref[...], h2, preferred_element_type=jnp.float32)
        o_ref[...] = o + b3_ref[0, 0]
    return kernel


def mine_forward(x, params, *, batch_tile=1024, use_bf16_matmul=False):
    """x: (B, input_size) float32.  Returns (B,) float32 (torch .squeeze())."""
    w1, b1, w2, b2, w3, b3 = params
    B, d_in = x.shape
    h1_dim = w1.shape[0]
    h2_dim = w2.shape[0]

    assert batch_tile % 128 == 0, "batch_tile must be a multiple of 128 (lane width)"
    tb = min(batch_tile, _round_up(B, 128))
    b_pad = _round_up(B, tb)
    grid = (b_pad // tb,)

    # Feature-major input; pad batch (lane) dim to a multiple of the tile.
    xT = jnp.pad(x.T, ((0, 0), (0, b_pad - B)))

    flops = 2 * b_pad * (d_in * h1_dim + h1_dim * h2_dim + h2_dim * 1)
    bytes_accessed = 4 * (b_pad * d_in + b_pad
                          + w1.size + b1.size + w2.size + b2.size + w3.size + b3.size)

    out = pl.pallas_call(
        _make_kernel(use_bf16_matmul),
        out_shape=jax.ShapeDtypeStruct((1, b_pad), jnp.float32),
        grid=grid,
        in_specs=[
            # x tile marches along the batch (lane) axis.
            pl.BlockSpec((d_in, tb), lambda i: (0, i)),
            # Weights / biases: constant index_map -> stay resident in VMEM.
            pl.BlockSpec(w1.shape, lambda i: (0, 0)),
            pl.BlockSpec(b1.shape, lambda i: (0, 0)),
            pl.BlockSpec(w2.shape, lambda i: (0, 0)),
            pl.BlockSpec(b2.shape, lambda i: (0, 0)),
            pl.BlockSpec(w3.shape, lambda i: (0, 0)),
            # Scalar final bias in SMEM (no (8,128) VMEM tile for one scalar).
            pl.BlockSpec(memory_space=pltpu.MemorySpace.SMEM),
        ],
        out_specs=pl.BlockSpec((1, tb), lambda i: (0, i)),   # lane-dense output
        compiler_params=pltpu.CompilerParams(
            dimension_semantics=("parallel",)),               # megacore-shardable on v7x
        cost_estimate=pl.CostEstimate(flops=flops, transcendentals=0,
                                      bytes_accessed=bytes_accessed),
    )(xT, w1, b1, w2, b2, w3, b3)

    return out[0, :B]


def init_params(key, input_size=INPUT_SIZE, mlp_dim=MLP_DIM, noise_std=NOISE_STD):
    """Deterministic init mirroring MINENet.init_weights:
       weight ~ Normal(0, noise_std) in PyTorch (out, in) layout, bias = 0."""
    dims = [input_size] + list(mlp_dim) + [1]
    params = []
    keys = jax.random.split(key, len(dims) - 1)
    for k, d_i, d_o in zip(keys, dims[:-1], dims[1:]):
        w = noise_std * jax.random.normal(k, (d_o, d_i), dtype=jnp.float32)  # (out, in)
        b = jnp.zeros((d_o, 1), dtype=jnp.float32)
        params += [w, b]
    return tuple(params)


def mine_forward_ref(x, params):
    """Pure-JAX reference for correctness check."""
    w1, b1, w2, b2, w3, b3 = params
    h = jnp.maximum(x @ w1.T + b1.T, 0.0)
    h = jnp.maximum(h @ w2.T + b2.T, 0.0)
    o = h @ w3.T + b3.T
    return jnp.squeeze(o, axis=-1)


if __name__ == "__main__":
    key = jax.random.PRNGKey(0)
    k_x, k_p, k_x2 = jax.random.split(key, 3)

    params = init_params(k_p)

    # Small test (B=8, padded internally to one 128-wide tile).
    B = 8
    x = jax.random.normal(k_x, (B, INPUT_SIZE), dtype=jnp.float32)
    ref = mine_forward_ref(x, params)

    out = jax.block_until_ready(mine_forward(x, params))
    assert out.shape == (B,), out.shape
    assert jnp.allclose(out, ref, atol=1e-5, rtol=1e-5), (out, ref)

    # Multi-tile grid with a ragged tail (B=300, TB=128 -> grid of 3, pad to 384).
    B2 = 300
    x2 = jax.random.normal(k_x2, (B2, INPUT_SIZE), dtype=jnp.float32)
    ref2 = mine_forward_ref(x2, params)
    out2 = jax.block_until_ready(mine_forward(x2, params, batch_tile=128))
    assert out2.shape == (B2,), out2.shape
    assert jnp.allclose(out2, ref2, atol=1e-5, rtol=1e-5), (out2, ref2)

    # bf16-fed MXU path for the dominant 128x128 layer (f32 accumulation):
    # relaxed tolerance vs the f32 reference.
    out_bf16 = jax.block_until_ready(mine_forward(x, params, use_bf16_matmul=True))
    assert jnp.allclose(out_bf16, ref, atol=2e-3, rtol=5e-2), (out_bf16, ref)

    print("KERNEL_OK")
</pallas_src>

<mosaic_0001>
module attributes {stable_mosaic.version = 11 : i64} {
  func.func @kernel(%arg0: i32, %arg1: memref<2x128xf32, #tpu.memory_space<vmem>>, %arg2: memref<128x2xf32, #tpu.memory_space<vmem>>, %arg3: memref<128x1xf32, #tpu.memory_space<vmem>>, %arg4: memref<128x128xf32, #tpu.memory_space<vmem>>, %arg5: memref<128x1xf32, #tpu.memory_space<vmem>>, %arg6: memref<1x128xf32, #tpu.memory_space<vmem>>, %arg7: memref<1x1xf32, #tpu.memory_space<smem>>, %arg8: memref<1x128xf32, #tpu.memory_space<vmem>>) attributes {dimension_semantics = [#tpu.dimension_semantics<parallel>], iteration_bounds = array<i64: 1>, scalar_prefetch = 0 : i64, scratch_operands = 0 : i64, tpu.core_type = #tpu.core_type<tc>, window_params = [{transform_indices = @transform_0, window_bounds = array<i64: 2, 128>}, {pipeline_mode = #tpu.pipeline_mode<synchronous>, transform_indices = @transform_1, window_bounds = array<i64: 128, 2>}, {pipeline_mode = #tpu.pipeline_mode<synchronous>, transform_indices = @transform_2, window_bounds = array<i64: 128, 1>}, {pipeline_mode = #tpu.pipeline_mode<synchronous>, transform_indices = @transform_3, window_bounds = array<i64: 128, 128>}, {pipeline_mode = #tpu.pipeline_mode<synchronous>, transform_indices = @transform_4, window_bounds = array<i64: 128, 1>}, {pipeline_mode = #tpu.pipeline_mode<synchronous>, transform_indices = @transform_5, window_bounds = array<i64: 1, 128>}, {transform_indices = @transform_6, window_bounds = array<i64: 1, 1>}, {transform_indices = @transform_7, window_bounds = array<i64: 1, 128>}]} {
    %c0 = arith.constant 0 : index
    %c0_0 = arith.constant 0 : index
    %0 = vector.load %arg1[%c0, %c0_0] : memref<2x128xf32, #tpu.memory_space<vmem>>, vector<2x128xf32>
    %c0_1 = arith.constant 0 : index
    %c0_2 = arith.constant 0 : index
    %1 = vector.load %arg2[%c0_1, %c0_2] : memref<128x2xf32, #tpu.memory_space<vmem>>, vector<128x2xf32>
    %2 = vector.extract_strided_slice %1 {offsets = [0, 0], sizes = [128, 1], strides = [1, 1]} : vector<128x2xf32> to vector<128x1xf32>
    %3 = vector.extract_strided_slice %0 {offsets = [0, 0], sizes = [1, 128], strides = [1, 1]} : vector<2x128xf32> to vector<1x128xf32>
    %4 = vector.broadcast %2 : vector<128x1xf32> to vector<128x128xf32>
    %5 = vector.broadcast %3 : vector<1x128xf32> to vector<128x128xf32>
    %6 = arith.mulf %4, %5 : vector<128x128xf32>
    %7 = vector.extract_strided_slice %1 {offsets = [0, 1], sizes = [128, 1], strides = [1, 1]} : vector<128x2xf32> to vector<128x1xf32>
    %8 = vector.extract_strided_slice %0 {offsets = [1, 0], sizes = [1, 128], strides = [1, 1]} : vector<2x128xf32> to vector<1x128xf32>
    %9 = vector.broadcast %7 : vector<128x1xf32> to vector<128x128xf32>
    %10 = vector.broadcast %8 : vector<1x128xf32> to vector<128x128xf32>
    %11 = arith.mulf %9, %10 : vector<128x128xf32>
    %12 = arith.addf %6, %11 : vector<128x128xf32>
    %c0_3 = arith.constant 0 : index
    %c0_4 = arith.constant 0 : index
    %13 = vector.load %arg3[%c0_3, %c0_4] : memref<128x1xf32, #tpu.memory_space<vmem>>, vector<128x1xf32>
    %14 = vector.broadcast %13 : vector<128x1xf32> to vector<128x128xf32>
    %15 = arith.addf %12, %14 : vector<128x128xf32>
    %cst = arith.constant 0.000000e+00 : f32
    %16 = vector.broadcast %cst : f32 to vector<128x128xf32>
    %17 = arith.maximumf %15, %16 : vector<128x128xf32>
    %c0_5 = arith.constant 0 : index
    %c0_6 = arith.constant 0 : index
    %18 = vector.load %arg4[%c0_5, %c0_6] : memref<128x128xf32, #tpu.memory_space<vmem>>, vector<128x128xf32>
    %cst_7 = arith.constant dense<0.000000e+00> : vector<128x128xf32>
    %19 = tpu.matmul %18, %17, %cst_7 {dimension_numbers = #tpu.dot_dimension_numbers<[1], [0], [0], [1], [0, 0, 1, 1], [], []>} : vector<128x128xf32>, vector<128x128xf32>, vector<128x128xf32> -> vector<128x128xf32>
    %c0_8 = arith.constant 0 : index
    %c0_9 = arith.constant 0 : index
    %20 = vector.load %arg5[%c0_8, %c0_9] : memref<128x1xf32, #tpu.memory_space<vmem>>, vector<128x1xf32>
    %21 = vector.broadcast %20 : vector<128x1xf32> to vector<128x128xf32>
    %22 = arith.addf %19, %21 : vector<128x128xf32>
    %cst_10 = arith.constant 0.000000e+00 : f32
    %23 = vector.broadcast %cst_10 : f32 to vector<128x128xf32>
    %24 = arith.maximumf %22, %23 : vector<128x128xf32>
    %c0_11 = arith.constant 0 : index
    %c0_12 = arith.constant 0 : index
    %25 = vector.load %arg6[%c0_11, %c0_12] : memref<1x128xf32, #tpu.memory_space<vmem>>, vector<1x128xf32>
    %cst_13 = arith.constant dense<0.000000e+00> : vector<1x128xf32>
    %26 = tpu.matmul %25, %24, %cst_13 {dimension_numbers = #tpu.dot_dimension_numbers<[1], [0], [0], [1], [0, 0, 1, 1], [], []>} : vector<1x128xf32>, vector<128x128xf32>, vector<1x128xf32> -> vector<1x128xf32>
    %c0_14 = arith.constant 0 : index
    %c0_15 = arith.constant 0 : index
    %27 = memref.load %arg7[%c0_14, %c0_15] : memref<1x1xf32, #tpu.memory_space<smem>>
    %28 = vector.broadcast %27 : f32 to vector<1x128xf32>
    %29 = arith.addf %26, %28 : vector<1x128xf32>
    %c0_16 = arith.constant 0 : index
    %c0_17 = arith.constant 0 : index
    %30 = vector.load %arg8[%c0_16, %c0_17] : memref<1x128xf32, #tpu.memory_space<vmem>>, vector<1x128xf32>
    tpu.vector_store %arg8[%c0_16, %c0_17], %29 {strides = array<i32>} : memref<1x128xf32, #tpu.memory_space<vmem>>, vector<1x128xf32>,
    return
  }
  func.func @transform_0(%arg0: i32) -> (i32, i32) {
    %c0_i32 = arith.constant 0 : i32
    %c0_i32_0 = arith.constant 0 : i32
    return %c0_i32, %arg0 : i32, i32
  }
  func.func @transform_1(%arg0: i32) -> (i32, i32) {
    %c0_i32 = arith.constant 0 : i32
    %c0_i32_0 = arith.constant 0 : i32
    %c0_i32_1 = arith.constant 0 : i32
    return %c0_i32, %c0_i32_0 : i32, i32
  }
  func.func @transform_2(%arg0: i32) -> (i32, i32) {
    %c0_i32 = arith.constant 0 : i32
    %c0_i32_0 = arith.constant 0 : i32
    %c0_i32_1 = arith.constant 0 : i32
    return %c0_i32, %c0_i32_0 : i32, i32
  }
  func.func @transform_3(%arg0: i32) -> (i32, i32) {
    %c0_i32 = arith.constant 0 : i32
    %c0_i32_0 = arith.constant 0 : i32
    %c0_i32_1 = arith.constant 0 : i32
    return %c0_i32, %c0_i32_0 : i32, i32
  }
  func.func @transform_4(%arg0: i32) -> (i32, i32) {
    %c0_i32 = arith.constant 0 : i32
    %c0_i32_0 = arith.constant 0 : i32
    %c0_i32_1 = arith.constant 0 : i32
    return %c0_i32, %c0_i32_0 : i32, i32
  }
  func.func @transform_5(%arg0: i32) -> (i32, i32) {
    %c0_i32 = arith.constant 0 : i32
    %c0_i32_0 = arith.constant 0 : i32
    %c0_i32_1 = arith.constant 0 : i32
    return %c0_i32, %c0_i32_0 : i32, i32
  }
  func.func @transform_6(%arg0: i32) -> (i32, i32) {
    %c0_i32 = arith.constant 0 : i32
    %c0_i32_0 = arith.constant 0 : i32
    %c0_i32_1 = arith.constant 0 : i32
    return %c0_i32, %c0_i32_0 : i32, i32
  }
  func.func @transform_7(%arg0: i32) -> (i32, i32) {
    %c0_i32 = arith.constant 0 : i32
    %c0_i32_0 = arith.constant 0 : i32
    return %c0_i32, %arg0 : i32, i32
  }
}

</mosaic_0001>

<llo_original>
// kernel: tpu_custom_call.1
$region0: #{tpu_custom_call.1}
  #allocation0 [shape = 'u32[]', space=smem, size = 0x4, offset = 0x4, fixed_abs, tag = 'smem constant byte address 0x4 - core index']
  #allocation1 [shape = 'u32[144,128]{1,0:T(1,128)}', space=vmem, size = 0x12000, scoped, tag = 'internal scratch']
  #allocation2 [shape = 'f32[1,1]{1,0:T(1,128)S(6)}', space=smem, size = 0x200, scoped, tag = 'scoped memory for tpu_custom_call.1']
  %s0 = inlined_call_operand.vmem [shape: f32[2,128], index: 0, kind: input, shape index: {}]
  %s1 = inlined_call_operand.vmem [shape: f32[128,2], index: 1, kind: input, shape index: {}]
  %s2 = inlined_call_operand.vmem [shape: f32[128,1], index: 2, kind: input, shape index: {}]
  %s3 = inlined_call_operand.vmem [shape: f32[128,128], index: 3, kind: input, shape index: {}]
  %s4 = inlined_call_operand.vmem [shape: f32[128,1], index: 4, kind: input, shape index: {}]
  %s5 = inlined_call_operand.vmem [shape: f32[1,128], index: 5, kind: input, shape index: {}]
  %s6 = inlined_call_operand.<no memory space> [shape: f32[1,1], index: 6, kind: input, shape index: {}]
  %s7 = inlined_call_operand.hbm [shape: f32[1,128], index: 7, kind: output, shape index: {}]
  %s8 = sld [smem:[#allocation0]]
  $region38: #{tpu_custom_call.1} parent=0
    _
  %s10 = ssub.s32 1, %s8
  %s11 = scalar_select 0, %s10, %s8
  %12 = sst [smem:[#allocation2]] %s6
  $region1: #{tpu_custom_call.1} parent=0
    #allocation3 [shape = 'u8[512]{0}', space=vmem, size = 0x400, scoped, tag = 'output window, operand 0, single buffered']
    #allocation4 [shape = 's32[1]{0}', space=sflag, size = 0x4, scoped, tag = 'scoped memory for tpu_custom_call.1']
    %13 = vsyncpa [#allocation4], 0
    // Predicated region
    $region2: #{tpu_custom_call.1} parent=1 // pred_check
      _
    $region3: #{tpu_custom_call.1} parent=1 // pred_check_branch
      %15 = sbr.rel (0) target = $region5
    $region4: #{tpu_custom_call.1} parent=1 // pred_region
      _
    $region5: #{tpu_custom_call.1} parent=1 // pred_fallthru
      _
    // Predicated region
    $region6: #{tpu_custom_call.1} parent=1 // pred_check
      _
    $region7: #{tpu_custom_call.1} parent=1 // pred_check_branch
      %17 = sbr.rel (0) target = $region9
    $region8: #{tpu_custom_call.1} parent=1 // pred_region
      _
    $region9: #{tpu_custom_call.1} parent=1 // pred_fallthru
      _
    // Predicated region
    $region10: #{tpu_custom_call.1} parent=1 // pred_check
      _
    $region11: #{tpu_custom_call.1} parent=1 // pred_check_branch
      %19 = sbr.rel (0) target = $region13
    $region12: #{tpu_custom_call.1} parent=1 // pred_region
      _
    $region13: #{tpu_custom_call.1} parent=1 // pred_fallthru
      _
    // Predicated region
    $region14: #{tpu_custom_call.1} parent=1 // pred_check
      _
    $region15: #{tpu_custom_call.1} parent=1 // pred_check_branch
      %21 = sbr.rel (0) target = $region17
    $region16: #{tpu_custom_call.1} parent=1 // pred_region
      _
    $region17: #{tpu_custom_call.1} parent=1 // pred_fallthru
      _
    // Predicated region
    $region18: #{tpu_custom_call.1} parent=1 // pred_check
      _
    $region19: #{tpu_custom_call.1} parent=1 // pred_check_branch
      %23 = sbr.rel (0) target = $region21
    $region20: #{tpu_custom_call.1} parent=1 // pred_region
      _
    $region21: #{tpu_custom_call.1} parent=1 // pred_fallthru
      _
    // Predicated region
    $region22: #{tpu_custom_call.1} parent=1 // pred_check
      _
    $region23: #{tpu_custom_call.1} parent=1 // pred_check_branch
      %25 = sbr.rel (0) target = $region25
    $region24: #{tpu_custom_call.1} parent=1 // pred_region
      _
    $region25: #{tpu_custom_call.1} parent=1 // pred_fallthru
      _
    // Predicated region
    $region26: #{tpu_custom_call.1} parent=1 // pred_check
      _
    $region27: #{tpu_custom_call.1} parent=1 // pred_check_branch
      %27 = sbr.rel (0) target = $region29
    $region28: #{tpu_custom_call.1} parent=1 // pred_region
      _
    $region29: #{tpu_custom_call.1} parent=1 // pred_fallthru
      _
    %v28 = vld [vmem:[%s0] sm:$0x3]
    %v29 = vld [vmem:[%s1] sm:$0xff]
    %v30 = vld [vmem:[%s1 + $0x8] sm:$0xff]
    %v31 = vld [vmem:[%s1 + $0x10] sm:$0xff]
    %v32 = vld [vmem:[%s1 + $0x18] sm:$0xff]
    %v33 = vld [vmem:[%s1 + $0x20] sm:$0xff]
    %v34 = vld [vmem:[%s1 + $0x28] sm:$0xff]
    %v35 = vld [vmem:[%s1 + $0x30] sm:$0xff]
    %v36 = vld [vmem:[%s1 + $0x38] sm:$0xff]
    %v37 = vld [vmem:[%s1 + $0x40] sm:$0xff]
    %v38 = vld [vmem:[%s1 + $0x48] sm:$0xff]
    %v39 = vld [vmem:[%s1 + $0x50] sm:$0xff]
    %v40 = vld [vmem:[%s1 + $0x58] sm:$0xff]
    %v41 = vld [vmem:[%s1 + $0x60] sm:$0xff]
    %v42 = vld [vmem:[%s1 + $0x68] sm:$0xff]
    %v43 = vld [vmem:[%s1 + $0x70] sm:$0xff]
    %v44 = vld [vmem:[%s1 + $0x78] sm:$0xff]
    %46 = vset.pattern.permute.xlu0 0
    %47 = vperm.xlu0 %46, %v29
    %v48 = vpop.permute.xlu0 %47
    %51 = vset.pattern.permute.xlu0 0
    %52 = vperm.xlu0 %51, %v30
    %v53 = vpop.permute.xlu0 %52
    %56 = vset.pattern.permute.xlu0 0
    %57 = vperm.xlu0 %56, %v31
    %v58 = vpop.permute.xlu0 %57
    %61 = vset.pattern.permute.xlu0 0
    %62 = vperm.xlu0 %61, %v32
    %v63 = vpop.permute.xlu0 %62
    %66 = vset.pattern.permute.xlu0 0
    %67 = vperm.xlu0 %66, %v33
    %v68 = vpop.permute.xlu0 %67
    %71 = vset.pattern.permute.xlu0 0
    %72 = vperm.xlu0 %71, %v34
    %v73 = vpop.permute.xlu0 %72
    %76 = vset.pattern.permute.xlu0 0
    %77 = vperm.xlu0 %76, %v35
    %v78 = vpop.permute.xlu0 %77
    %81 = vset.pattern.permute.xlu0 0
    %82 = vperm.xlu0 %81, %v36
    %v83 = vpop.permute.xlu0 %82
    %86 = vset.pattern.permute.xlu0 0
    %87 = vperm.xlu0 %86, %v37
    %v88 = vpop.permute.xlu0 %87
    %91 = vset.pattern.permute.xlu0 0
    %92 = vperm.xlu0 %91, %v38
    %v93 = vpop.permute.xlu0 %92
    %96 = vset.pattern.permute.xlu0 0
    %97 = vperm.xlu0 %96, %v39
    %v98 = vpop.permute.xlu0 %97
    %101 = vset.pattern.permute.xlu0 0
    %102 = vperm.xlu0 %101, %v40
    %v103 = vpop.permute.xlu0 %102
    %106 = vset.pattern.permute.xlu0 0
    %107 = vperm.xlu0 %106, %v41
    %v108 = vpop.permute.xlu0 %107
    %111 = vset.pattern.permute.xlu0 0
    %112 = vperm.xlu0 %111, %v42
    %v113 = vpop.permute.xlu0 %112
    %116 = vset.pattern.permute.xlu0 0
    %117 = vperm.xlu0 %116, %v43
    %v118 = vpop.permute.xlu0 %117
    %121 = vset.pattern.permute.xlu0 0
    %122 = vperm.xlu0 %121, %v44
    %v123 = vpop.permute.xlu0 %122
    %v125 = vlaneseq
    %v126 = vshrl.u32 %v125, 7
    %v127 = vsub.s32 0, %v126
    %v128 = vrot.slane %v28, %v127
    %v129 = vmul.f32 %v48, %v128
    %v130 = vmul.f32 %v53, %v128
    %v131 = vmul.f32 %v58, %v128
    %v132 = vmul.f32 %v63, %v128
    %v133 = vmul.f32 %v68, %v128
    %v134 = vmul.f32 %v73, %v128
    %v135 = vmul.f32 %v78, %v128
    %v136 = vmul.f32 %v83, %v128
    %v137 = vmul.f32 %v88, %v128
    %v138 = vmul.f32 %v93, %v128
    %v139 = vmul.f32 %v98, %v128
    %v140 = vmul.f32 %v103, %v128
    %v141 = vmul.f32 %v108, %v128
    %v142 = vmul.f32 %v113, %v128
    %v143 = vmul.f32 %v118, %v128
    %v144 = vmul.f32 %v123, %v128
    %145 = vset.pattern.permute.xlu0 1
    %146 = vperm.xlu0 %145, %v29
    %v147 = vpop.permute.xlu0 %146
    %149 = vset.pattern.permute.xlu0 1
    %150 = vperm.xlu0 %149, %v30
    %v151 = vpop.permute.xlu0 %150
    %153 = vset.pattern.permute.xlu0 1
    %154 = vperm.xlu0 %153, %v31
    %v155 = vpop.permute.xlu0 %154
    %157 = vset.pattern.permute.xlu0 1
    %158 = vperm.xlu0 %157, %v32
    %v159 = vpop.permute.xlu0 %158
    %161 = vset.pattern.permute.xlu0 1
    %162 = vperm.xlu0 %161, %v33
    %v163 = vpop.permute.xlu0 %162
    %165 = vset.pattern.permute.xlu0 1
    %166 = vperm.xlu0 %165, %v34
    %v167 = vpop.permute.xlu0 %166
    %169 = vset.pattern.permute.xlu0 1
    %170 = vperm.xlu0 %169, %v35
    %v171 = vpop.permute.xlu0 %170
    %173 = vset.pattern.permute.xlu0 1
    %174 = vperm.xlu0 %173, %v36
    %v175 = vpop.permute.xlu0 %174
    %177 = vset.pattern.permute.xlu0 1
    %178 = vperm.xlu0 %177, %v37
    %v179 = vpop.permute.xlu0 %178
    %181 = vset.pattern.permute.xlu0 1
    %182 = vperm.xlu0 %181, %v38
    %v183 = vpop.permute.xlu0 %182
    %185 = vset.pattern.permute.xlu0 1
    %186 = vperm.xlu0 %185, %v39
    %v187 = vpop.permute.xlu0 %186
    %189 = vset.pattern.permute.xlu0 1
    %190 = vperm.xlu0 %189, %v40
    %v191 = vpop.permute.xlu0 %190
    %193 = vset.pattern.permute.xlu0 1
    %194 = vperm.xlu0 %193, %v41
    %v195 = vpop.permute.xlu0 %194
    %197 = vset.pattern.permute.xlu0 1
    %198 = vperm.xlu0 %197, %v42
    %v199 = vpop.permute.xlu0 %198
    %201 = vset.pattern.permute.xlu0 1
    %202 = vperm.xlu0 %201, %v43
    %v203 = vpop.permute.xlu0 %202
    %205 = vset.pattern.permute.xlu0 1
    %206 = vperm.xlu0 %205, %v44
    %v207 = vpop.permute.xlu0 %206
    %v209 = vlaneseq
    %v210 = vshrl.u32 %v209, 7
    %v211 = vsub.s32 1, %v210
    %v212 = vrot.slane %v28, %v211
    %v213 = vmul.f32 %v147, %v212
    %v214 = vmul.f32 %v151, %v212
    %v215 = vmul.f32 %v155, %v212
    %v216 = vmul.f32 %v159, %v212
    %v217 = vmul.f32 %v163, %v212
    %v218 = vmul.f32 %v167, %v212
    %v219 = vmul.f32 %v171, %v212
    %v220 = vmul.f32 %v175, %v212
    %v221 = vmul.f32 %v179, %v212
    %v222 = vmul.f32 %v183, %v212
    %v223 = vmul.f32 %v187, %v212
    %v224 = vmul.f32 %v191, %v212
    %v225 = vmul.f32 %v195, %v212
    %v226 = vmul.f32 %v199, %v212
    %v227 = vmul.f32 %v203, %v212
    %v228 = vmul.f32 %v207, %v212
    %v229 = vadd.f32 %v129, %v213
    %v230 = vadd.f32 %v130, %v214
    %v231 = vadd.f32 %v131, %v215
    %v232 = vadd.f32 %v132, %v216
    %v233 = vadd.f32 %v133, %v217
    %v234 = vadd.f32 %v134, %v218
    %v235 = vadd.f32 %v135, %v219
    %v236 = vadd.f32 %v136, %v220
    %v237 = vadd.f32 %v137, %v221
    %v238 = vadd.f32 %v138, %v222
    %v239 = vadd.f32 %v139, %v223
    %v240 = vadd.f32 %v140, %v224
    %v241 = vadd.f32 %v141, %v225
    %v242 = vadd.f32 %v142, %v226
    %v243 = vadd.f32 %v143, %v227
    %v244 = vadd.f32 %v144, %v228
    %v245 = vld [vmem:[%s2] sm:$0xff]
    %v246 = vld [vmem:[%s2 + $0x8] sm:$0xff]
    %v247 = vld [vmem:[%s2 + $0x10] sm:$0xff]
    %v248 = vld [vmem:[%s2 + $0x18] sm:$0xff]
    %v249 = vld [vmem:[%s2 + $0x20] sm:$0xff]
    %v250 = vld [vmem:[%s2 + $0x28] sm:$0xff]
    %v251 = vld [vmem:[%s2 + $0x30] sm:$0xff]
    %v252 = vld [vmem:[%s2 + $0x38] sm:$0xff]
    %v253 = vld [vmem:[%s2 + $0x40] sm:$0xff]
    %v254 = vld [vmem:[%s2 + $0x48] sm:$0xff]
    %v255 = vld [vmem:[%s2 + $0x50] sm:$0xff]
    %v256 = vld [vmem:[%s2 + $0x58] sm:$0xff]
    %v257 = vld [vmem:[%s2 + $0x60] sm:$0xff]
    %v258 = vld [vmem:[%s2 + $0x68] sm:$0xff]
    %v259 = vld [vmem:[%s2 + $0x70] sm:$0xff]
    %v260 = vld [vmem:[%s2 + $0x78] sm:$0xff]
    %262 = vset.pattern.permute.xlu0 0
    %263 = vperm.xlu0 %262, %v245
    %v264 = vpop.permute.xlu0 %263
    %267 = vset.pattern.permute.xlu0 0
    %268 = vperm.xlu0 %267, %v246
    %v269 = vpop.permute.xlu0 %268
    %272 = vset.pattern.permute.xlu0 0
    %273 = vperm.xlu0 %272, %v247
    %v274 = vpop.permute.xlu0 %273
    %277 = vset.pattern.permute.xlu0 0
    %278 = vperm.xlu0 %277, %v248
    %v279 = vpop.permute.xlu0 %278
    %282 = vset.pattern.permute.xlu0 0
    %283 = vperm.xlu0 %282, %v249
    %v284 = vpop.permute.xlu0 %283
    %287 = vset.pattern.permute.xlu0 0
    %288 = vperm.xlu0 %287, %v250
    %v289 = vpop.permute.xlu0 %288
    %292 = vset.pattern.permute.xlu0 0
    %293 = vperm.xlu0 %292, %v251
    %v294 = vpop.permute.xlu0 %293
    %297 = vset.pattern.permute.xlu0 0
    %298 = vperm.xlu0 %297, %v252
    %v299 = vpop.permute.xlu0 %298
    %302 = vset.pattern.permute.xlu0 0
    %303 = vperm.xlu0 %302, %v253
    %v304 = vpop.permute.xlu0 %303
    %307 = vset.pattern.permute.xlu0 0
    %308 = vperm.xlu0 %307, %v254
    %v309 = vpop.permute.xlu0 %308
    %312 = vset.pattern.permute.xlu0 0
    %313 = vperm.xlu0 %312, %v255
    %v314 = vpop.permute.xlu0 %313
    %317 = vset.pattern.permute.xlu0 0
    %318 = vperm.xlu0 %317, %v256
    %v319 = vpop.permute.xlu0 %318
    %322 = vset.pattern.permute.xlu0 0
    %323 = vperm.xlu0 %322, %v257
    %v324 = vpop.permute.xlu0 %323
    %327 = vset.pattern.permute.xlu0 0
    %328 = vperm.xlu0 %327, %v258
    %v329 = vpop.permute.xlu0 %328
    %332 = vset.pattern.permute.xlu0 0
    %333 = vperm.xlu0 %332, %v259
    %v334 = vpop.permute.xlu0 %333
    %337 = vset.pattern.permute.xlu0 0
    %338 = vperm.xlu0 %337, %v260
    %v339 = vpop.permute.xlu0 %338
    %v341 = vadd.f32 %v229, %v264
    %v342 = vadd.f32 %v230, %v269
    %v343 = vadd.f32 %v231, %v274
    %v344 = vadd.f32 %v232, %v279
    %v345 = vadd.f32 %v233, %v284
    %v346 = vadd.f32 %v234, %v289
    %v347 = vadd.f32 %v235, %v294
    %v348 = vadd.f32 %v236, %v299
    %v349 = vadd.f32 %v237, %v304
    %v350 = vadd.f32 %v238, %v309
    %v351 = vadd.f32 %v239, %v314
    %v352 = vadd.f32 %v240, %v319
    %v353 = vadd.f32 %v241, %v324
    %v354 = vadd.f32 %v242, %v329
    %v355 = vadd.f32 %v243, %v334
    %v356 = vadd.f32 %v244, %v339
    %v357 = vmax.f32 %v341, 0.0
    %v358 = vmax.f32 %v342, 0.0
    %v359 = vmax.f32 %v343, 0.0
    %v360 = vmax.f32 %v344, 0.0
    %v361 = vmax.f32 %v345, 0.0
    %v362 = vmax.f32 %v346, 0.0
    %v363 = vmax.f32 %v347, 0.0
    %v364 = vmax.f32 %v348, 0.0
    %v365 = vmax.f32 %v349, 0.0
    %v366 = vmax.f32 %v350, 0.0
    %v367 = vmax.f32 %v351, 0.0
    %v368 = vmax.f32 %v352, 0.0
    %v369 = vmax.f32 %v353, 0.0
    %v370 = vmax.f32 %v354, 0.0
    %v371 = vmax.f32 %v355, 0.0
    %v372 = vmax.f32 %v356, 0.0
    %v373 = vld [vmem:[%s3] sm:$0xff]
    %v374 = vld [vmem:[%s3 + $0x8] sm:$0xff]
    %v375 = vld [vmem:[%s3 + $0x10] sm:$0xff]
    %v376 = vld [vmem:[%s3 + $0x18] sm:$0xff]
    %v377 = vld [vmem:[%s3 + $0x20] sm:$0xff]
    %v378 = vld [vmem:[%s3 + $0x28] sm:$0xff]
    %v379 = vld [vmem:[%s3 + $0x30] sm:$0xff]
    %v380 = vld [vmem:[%s3 + $0x38] sm:$0xff]
    %v381 = vld [vmem:[%s3 + $0x40] sm:$0xff]
    %v382 = vld [vmem:[%s3 + $0x48] sm:$0xff]
    %v383 = vld [vmem:[%s3 + $0x50] sm:$0xff]
    %v384 = vld [vmem:[%s3 + $0x58] sm:$0xff]
    %v385 = vld [vmem:[%s3 + $0x60] sm:$0xff]
    %v386 = vld [vmem:[%s3 + $0x68] sm:$0xff]
    %v387 = vld [vmem:[%s3 + $0x70] sm:$0xff]
    %v388 = vld [vmem:[%s3 + $0x78] sm:$0xff]
    %v389 = vld [vmem:[%s4] sm:$0xff]
    %v390 = vld [vmem:[%s4 + $0x8] sm:$0xff]
    %v391 = vld [vmem:[%s4 + $0x10] sm:$0xff]
    %v392 = vld [vmem:[%s4 + $0x18] sm:$0xff]
    %v393 = vld [vmem:[%s4 + $0x20] sm:$0xff]
    %v394 = vld [vmem:[%s4 + $0x28] sm:$0xff]
    %v395 = vld [vmem:[%s4 + $0x30] sm:$0xff]
    %v396 = vld [vmem:[%s4 + $0x38] sm:$0xff]
    %v397 = vld [vmem:[%s4 + $0x40] sm:$0xff]
    %v398 = vld [vmem:[%s4 + $0x48] sm:$0xff]
    %v399 = vld [vmem:[%s4 + $0x50] sm:$0xff]
    %v400 = vld [vmem:[%s4 + $0x58] sm:$0xff]
    %v401 = vld [vmem:[%s4 + $0x60] sm:$0xff]
    %v402 = vld [vmem:[%s4 + $0x68] sm:$0xff]
    %v403 = vld [vmem:[%s4 + $0x70] sm:$0xff]
    %v404 = vld [vmem:[%s4 + $0x78] sm:$0xff]
    %406 = vset.pattern.permute.xlu0 0
    %407 = vperm.xlu0 %406, %v389
    %v408 = vpop.permute.xlu0 %407
    %411 = vset.pattern.permute.xlu0 0
    %412 = vperm.xlu0 %411, %v390
    %v413 = vpop.permute.xlu0 %412
    %416 = vset.pattern.permute.xlu0 0
    %417 = vperm.xlu0 %416, %v391
    %v418 = vpop.permute.xlu0 %417
    %421 = vset.pattern.permute.xlu0 0
    %422 = vperm.xlu0 %421, %v392
    %v423 = vpop.permute.xlu0 %422
    %426 = vset.pattern.permute.xlu0 0
    %427 = vperm.xlu0 %426, %v393
    %v428 = vpop.permute.xlu0 %427
    %431 = vset.pattern.permute.xlu0 0
    %432 = vperm.xlu0 %431, %v394
    %v433 = vpop.permute.xlu0 %432
    %436 = vset.pattern.permute.xlu0 0
    %437 = vperm.xlu0 %436, %v395
    %v438 = vpop.permute.xlu0 %437
    %441 = vset.pattern.permute.xlu0 0
    %442 = vperm.xlu0 %441, %v396
    %v443 = vpop.permute.xlu0 %442
    %446 = vset.pattern.permute.xlu0 0
    %447 = vperm.xlu0 %446, %v397
    %v448 = vpop.permute.xlu0 %447
    %451 = vset.pattern.permute.xlu0 0
    %452 = vperm.xlu0 %451, %v398
    %v453 = vpop.permute.xlu0 %452
    %456 = vset.pattern.permute.xlu0 0
    %457 = vperm.xlu0 %456, %v399
    %v458 = vpop.permute.xlu0 %457
    %461 = vset.pattern.permute.xlu0 0
    %462 = vperm.xlu0 %461, %v400
    %v463 = vpop.permute.xlu0 %462
    %466 = vset.pattern.permute.xlu0 0
    %467 = vperm.xlu0 %466, %v401
    %v468 = vpop.permute.xlu0 %467
    %471 = vset.pattern.permute.xlu0 0
    %472 = vperm.xlu0 %471, %v402
    %v473 = vpop.permute.xlu0 %472
    %476 = vset.pattern.permute.xlu0 0
    %477 = vperm.xlu0 %476, %v403
    %v478 = vpop.permute.xlu0 %477
    %481 = vset.pattern.permute.xlu0 0
    %482 = vperm.xlu0 %481, %v404
    %v483 = vpop.permute.xlu0 %482
    %485 = vmatprep.subr.mxu0 0.0
    %486 = vmatpush1.msra.mxu0 %v357
    %487 = vmatprep.subr.mxu0 0.0
    %488 = vmatpush1.msra.mxu0 %v358
    %489 = vmatprep.subr.mxu0 0.0
    %490 = vmatpush1.msra.mxu0 %v359
    %491 = vmatprep.subr.mxu0 0.0
    %492 = vmatpush1.msra.mxu0 %v360
    %493 = vmatprep.subr.mxu0 0.0
    %494 = vmatpush1.msra.mxu0 %v361
    %495 = vmatprep.subr.mxu0 0.0
    %496 = vmatpush1.msra.mxu0 %v362
    %497 = vmatprep.subr.mxu0 0.0
    %498 = vmatpush1.msra.mxu0 %v363
    %499 = vmatprep.subr.mxu0 0.0
    %500 = vmatpush1.msra.mxu0 %v364
    %501 = vmatprep.subr.mxu0 0.0
    %502 = vmatpush1.msra.mxu0 %v365
    %503 = vmatprep.subr.mxu0 0.0
    %504 = vmatpush1.msra.mxu0 %v366
    %505 = vmatprep.subr.mxu0 0.0
    %506 = vmatpush1.msra.mxu0 %v367
    %507 = vmatprep.subr.mxu0 0.0
    %508 = vmatpush1.msra.mxu0 %v368
    %509 = vmatprep.subr.mxu0 0.0
    %510 = vmatpush1.msra.mxu0 %v369
    %511 = vmatprep.subr.mxu0 0.0
    %512 = vmatpush1.msra.mxu0 %v370
    %513 = vmatprep.subr.mxu0 0.0
    %514 = vmatpush1.msra.mxu0 %v371
    %515 = vmatprep.subr.mxu0 0.0
    %516 = vmatpush1.msra.mxu0 %v372
    %517 = vmatprep.subr.mxu0 0.0
    %518 = vmatpush1.msra.mxu0 0.0
    %519 = vmatprep.subr.mxu0 0.0
    %520 = vmatpush1.msra.mxu0 0.0
    %521 = vmatprep.subr.mxu0 0.0
    %522 = vmatpush1.msra.mxu0 0.0
    %523 = vmatprep.subr.mxu0 0.0
    %524 = vmatpush1.msra.mxu0 0.0
    %525 = vmatprep.subr.mxu0 0.0
    %526 = vmatpush1.msra.mxu0 0.0
    %527 = vmatprep.subr.mxu0 0.0
    %528 = vmatpush1.msra.mxu0 0.0
    %529 = vmatprep.subr.mxu0 0.0
    %530 = vmatpush1.msra.mxu0 0.0
    %531 = vmatprep.subr.mxu0 0.0
    %532 = vmatpush1.msra.mxu0 0.0
    %533 = vmatprep.subr.mxu0 0.0
    %534 = vmatpush1.msra.mxu0 0.0
    %535 = vmatprep.subr.mxu0 0.0
    %536 = vmatpush1.msra.mxu0 0.0
    %537 = vmatprep.subr.mxu0 0.0
    %538 = vmatpush1.msra.mxu0 0.0
    %539 = vmatprep.subr.mxu0 0.0
    %540 = vmatpush1.msra.mxu0 0.0
    %541 = vmatprep.subr.mxu0 0.0
    %542 = vmatpush1.msra.mxu0 0.0
    %543 = vmatprep.subr.mxu0 0.0
    %544 = vmatpush1.msra.mxu0 0.0
    %545 = vmatprep.subr.mxu0 0.0
    %546 = vmatpush1.msra.mxu0 0.0
    %547 = vmatprep.subr.mxu0 0.0
    %548 = vmatpush1.msra.mxu0 0.0
    %549 = vmatprep.mubr.f32.mxu0 0.0
    %550 = vmatmul.mubr.f32.gmra.mrb[0].mxu0 %v373
    %v551 = vpop.f32.mrb[0].mxu0
    %v552 = vadd.f32 %v408, %v551
    %v553 = vpop.f32.mrb[0].mxu0
    %554 = vmatprep.mubr.f32.mxu0 0.0
    %555 = vmatmul.mubr.f32.gmra.mrb[0].mxu0 %v374
    %v556 = vpop.f32.mrb[0].mxu0
    %v557 = vadd.f32 %v413, %v556
    %v558 = vpop.f32.mrb[0].mxu0
    %559 = vmatprep.mubr.f32.mxu0 0.0
    %560 = vmatmul.mubr.f32.gmra.mrb[0].mxu0 %v375
    %v561 = vpop.f32.mrb[0].mxu0
    %v562 = vadd.f32 %v418, %v561
    %v563 = vpop.f32.mrb[0].mxu0
    %564 = vmatprep.mubr.f32.mxu0 0.0
    %565 = vmatmul.mubr.f32.gmra.mrb[0].mxu0 %v376
    %v566 = vpop.f32.mrb[0].mxu0
    %v567 = vadd.f32 %v423, %v566
    %v568 = vpop.f32.mrb[0].mxu0
    %569 = vmatprep.mubr.f32.mxu0 0.0
    %570 = vmatmul.mubr.f32.gmra.mrb[0].mxu0 %v377
    %v571 = vpop.f32.mrb[0].mxu0
    %v572 = vadd.f32 %v428, %v571
    %v573 = vpop.f32.mrb[0].mxu0
    %574 = vmatprep.mubr.f32.mxu0 0.0
    %575 = vmatmul.mubr.f32.gmra.mrb[0].mxu0 %v378
    %v576 = vpop.f32.mrb[0].mxu0
    %v577 = vadd.f32 %v433, %v576
    %v578 = vpop.f32.mrb[0].mxu0
    %579 = vmatprep.mubr.f32.mxu0 0.0
    %580 = vmatmul.mubr.f32.gmra.mrb[0].mxu0 %v379
    %v581 = vpop.f32.mrb[0].mxu0
    %v582 = vadd.f32 %v438, %v581
    %v583 = vpop.f32.mrb[0].mxu0
    %584 = vmatprep.mubr.f32.mxu0 0.0
    %585 = vmatmul.mubr.f32.gmra.mrb[0].mxu0 %v380
    %v586 = vpop.f32.mrb[0].mxu0
    %v587 = vadd.f32 %v443, %v586
    %v588 = vpop.f32.mrb[0].mxu0
    %589 = vmatprep.mubr.f32.mxu0 0.0
    %590 = vmatmul.mubr.f32.gmra.mrb[0].mxu0 %v381
    %v591 = vpop.f32.mrb[0].mxu0
    %v592 = vadd.f32 %v448, %v591
    %v593 = vpop.f32.mrb[0].mxu0
    %594 = vmatprep.mubr.f32.mxu0 0.0
    %595 = vmatmul.mubr.f32.gmra.mrb[0].mxu0 %v382
    %v596 = vpop.f32.mrb[0].mxu0
    %v597 = vadd.f32 %v453, %v596
    %v598 = vpop.f32.mrb[0].mxu0
    %599 = vmatprep.mubr.f32.mxu0 0.0
    %600 = vmatmul.mubr.f32.gmra.mrb[0].mxu0 %v383
    %v601 = vpop.f32.mrb[0].mxu0
    %v602 = vadd.f32 %v458, %v601
    %v603 = vpop.f32.mrb[0].mxu0
    %604 = vmatprep.mubr.f32.mxu0 0.0
    %605 = vmatmul.mubr.f32.gmra.mrb[0].mxu0 %v384
    %v606 = vpop.f32.mrb[0].mxu0
    %v607 = vadd.f32 %v463, %v606
    %v608 = vpop.f32.mrb[0].mxu0
    %609 = vmatprep.mubr.f32.mxu0 0.0
    %610 = vmatmul.mubr.f32.gmra.mrb[0].mxu0 %v385
    %v611 = vpop.f32.mrb[0].mxu0
    %v612 = vadd.f32 %v468, %v611
    %v613 = vpop.f32.mrb[0].mxu0
    %614 = vmatprep.mubr.f32.mxu0 0.0
    %615 = vmatmul.mubr.f32.gmra.mrb[0].mxu0 %v386
    %v616 = vpop.f32.mrb[0].mxu0
    %v617 = vadd.f32 %v473, %v616
    %v618 = vpop.f32.mrb[0].mxu0
    %619 = vmatprep.mubr.f32.mxu0 0.0
    %620 = vmatmul.mubr.f32.gmra.mrb[0].mxu0 %v387
    %v621 = vpop.f32.mrb[0].mxu0
    %v622 = vadd.f32 %v478, %v621
    %v623 = vpop.f32.mrb[0].mxu0
    %624 = vmatprep.mubr.f32.mxu0 0.0
    %625 = vmatmul.mubr.f32.gmra.mrb[0].mxu0 %v388
    %v626 = vpop.f32.mrb[0].mxu0
    %v627 = vadd.f32 %v483, %v626
    %v628 = vpop.f32.mrb[0].mxu0
    %629 = vdwg.mxu0
    %v630 = vmax.f32 %v552, 0.0
    %v631 = vmax.f32 %v557, 0.0
    %v632 = vmax.f32 %v562, 0.0
    %v633 = vmax.f32 %v567, 0.0
    %v634 = vmax.f32 %v572, 0.0
    %v635 = vmax.f32 %v577, 0.0
    %v636 = vmax.f32 %v582, 0.0
    %v637 = vmax.f32 %v587, 0.0
    %v638 = vmax.f32 %v592, 0.0
    %v639 = vmax.f32 %v597, 0.0
    %v640 = vmax.f32 %v602, 0.0
    %v641 = vmax.f32 %v607, 0.0
    %v642 = vmax.f32 %v612, 0.0
    %v643 = vmax.f32 %v617, 0.0
    %v644 = vmax.f32 %v622, 0.0
    %v645 = vmax.f32 %v627, 0.0
    %v646 = vld [vmem:[%s5] sm:$0x1]
    %s647 = sld [smem:[#allocation2]]
    %v648 = vstv %s647
    %649 = vmatprep.subr.mxu0 0.0
    %650 = vmatpush1.msra.mxu0 %v630
    %651 = vmatprep.subr.mxu0 0.0
    %652 = vmatpush1.msra.mxu0 %v631
    %653 = vmatprep.subr.mxu0 0.0
    %654 = vmatpush1.msra.mxu0 %v632
    %655 = vmatprep.subr.mxu0 0.0
    %656 = vmatpush1.msra.mxu0 %v633
    %657 = vmatprep.subr.mxu0 0.0
    %658 = vmatpush1.msra.mxu0 %v634
    %659 = vmatprep.subr.mxu0 0.0
    %660 = vmatpush1.msra.mxu0 %v635
    %661 = vmatprep.subr.mxu0 0.0
    %662 = vmatpush1.msra.mxu0 %v636
    %663 = vmatprep.subr.mxu0 0.0
    %664 = vmatpush1.msra.mxu0 %v637
    %665 = vmatprep.subr.mxu0 0.0
    %666 = vmatpush1.msra.mxu0 %v638
    %667 = vmatprep.subr.mxu0 0.0
    %668 = vmatpush1.msra.mxu0 %v639
    %669 = vmatprep.subr.mxu0 0.0
    %670 = vmatpush1.msra.mxu0 %v640
    %671 = vmatprep.subr.mxu0 0.0
    %672 = vmatpush1.msra.mxu0 %v641
    %673 = vmatprep.subr.mxu0 0.0
    %674 = vmatpush1.msra.mxu0 %v642
    %675 = vmatprep.subr.mxu0 0.0
    %676 = vmatpush1.msra.mxu0 %v643
    %677 = vmatprep.subr.mxu0 0.0
    %678 = vmatpush1.msra.mxu0 %v644
    %679 = vmatprep.subr.mxu0 0.0
    %680 = vmatpush1.msra.mxu0 %v645
    %681 = vmatprep.subr.mxu0 0.0
    %682 = vmatpush1.msra.mxu0 0.0
    %683 = vmatprep.subr.mxu0 0.0
    %684 = vmatpush1.msra.mxu0 0.0
    %685 = vmatprep.subr.mxu0 0.0
    %686 = vmatpush1.msra.mxu0 0.0
    %687 = vmatprep.subr.mxu0 0.0
    %688 = vmatpush1.msra.mxu0 0.0
    %689 = vmatprep.subr.mxu0 0.0
    %690 = vmatpush1.msra.mxu0 0.0
    %691 = vmatprep.subr.mxu0 0.0
    %692 = vmatpush1.msra.mxu0 0.0
    %693 = vmatprep.subr.mxu0 0.0
    %694 = vmatpush1.msra.mxu0 0.0
    %695 = vmatprep.subr.mxu0 0.0
    %696 = vmatpush1.msra.mxu0 0.0
    %697 = vmatprep.subr.mxu0 0.0
    %698 = vmatpush1.msra.mxu0 0.0
    %699 = vmatprep.subr.mxu0 0.0
    %700 = vmatpush1.msra.mxu0 0.0
    %701 = vmatprep.subr.mxu0 0.0
    %702 = vmatpush1.msra.mxu0 0.0
    %703 = vmatprep.subr.mxu0 0.0
    %704 = vmatpush1.msra.mxu0 0.0
    %705 = vmatprep.subr.mxu0 0.0
    %706 = vmatpush1.msra.mxu0 0.0
    %707 = vmatprep.subr.mxu0 0.0
    %708 = vmatpush1.msra.mxu0 0.0
    %709 = vmatprep.subr.mxu0 0.0
    %710 = vmatpush1.msra.mxu0 0.0
    %711 = vmatprep.subr.mxu0 0.0
    %712 = vmatpush1.msra.mxu0 0.0
    %713 = vmatprep.mubr.f32.mxu0 0.0
    %714 = vmatmul.mubr.f32.gmra.mrb[0].mxu0 %v646
    %v715 = vpop.f32.mrb[0].mxu0
    %v716 = vadd.f32 %v648, %v715
    %v717 = vpop.f32.mrb[0].mxu0
    %718 = vdwg.mxu0
    %719 = vst [vmem:[#allocation3] sm:$0x1] %v716
    // Predicated region
    $region30: #{tpu_custom_call.1} parent=1 // pred_check
      _
    $region31: #{tpu_custom_call.1} parent=1 // pred_check_branch
      %721 = sbr.rel (0) target = $region33
    $region32: #{tpu_custom_call.1} parent=1 // pred_region
      %s723 = ssub.s32 16, 16
      %724 = vsyncadd [#allocation4], %s723
      %s726 = sshll.u32 [#allocation3], 4
      %s727 = int_to_ptr.vmem [resolvable:$true] %s726
      %729 = dma.vmem_to_hbm [thread:$0]  %s727, 16, %s7, [#allocation4]
    $region33: #{tpu_custom_call.1} parent=1 // pred_fallthru
      _
    // Predicated region
    $region34: #{tpu_custom_call.1} parent=1 // pred_check
      _
    $region35: #{tpu_custom_call.1} parent=1 // pred_check_branch
      %731 = sbr.rel (0) target = $region37
    $region36: #{tpu_custom_call.1} parent=1 // pred_region
      %732 = dma.done [#allocation4], 16
    $region37: #{tpu_custom_call.1} parent=1 // pred_fallthru
      _
    %733 = vsyncpa [#allocation4], 1

</llo_original>
